<compile_context>
chip_gen: v6e
topology: v6e:2x2x1
jax: 0.10.0
libtpu: 0.0.40
codegen_flags: <defaults>
</compile_context>

<pallas_src>
import jax
import jax.numpy as jnp
from jax.experimental import pallas as pl
from jax.experimental.pallas import tpu as pltpu


def _swish_kernel(beta_ref, x_ref, o_ref):
    # beta_ref: (1, 1) f32 scalar in SMEM.  x_ref / o_ref: (row_tile, lanes) VMEM tiles.
    beta = beta_ref[0, 0]
    x = x_ref[...].astype(jnp.float32)            # upcast (or int->f32 cast) in-register only
    # sigmoid(beta*x) == 0.5 * (1 + tanh(0.5*beta*x)): single EUP op per vreg.
    z = (0.5 * beta) * x
    y = x * (0.5 * (1.0 + jnp.tanh(z)))
    o_ref[...] = y.astype(o_ref.dtype)


def _choose_layout(n):
    """Pick a (rows, lanes) view of the flat length-n array, or None if n % 128 != 0."""
    # Prefer a layout whose row count is a multiple of 8 (full sublane tiles).
    for lanes in (1024, 512, 256, 128):
        if n % lanes == 0 and (n // lanes) % 8 == 0:
            return n // lanes, lanes
    for lanes in (1024, 512, 256, 128):
        if n % lanes == 0:
            return n // lanes, lanes
    return None


def _device_memory_config():
    """(target bytes per buffer per step, vmem_limit_bytes or None)."""
    try:
        vmem = pltpu.get_tpu_info().vmem_capacity_bytes
    except Exception:
        # Unknown part: 2 MiB tiles (8 MiB double-buffered in+out) fits every
        # default scoped-VMEM limit (16 MiB on v5e, 32 MiB on v6e/v7x).
        return 2 << 20, None
    if vmem >= (100 << 20):
        # v5e / v6e / v4 / v5p class: 128 MiB physical VMEM.
        return 8 << 20, 64 << 20          # footprint: 2 bufs x (in + out) = 32 MiB
    # v7x class: 64 MiB physical per TensorCore; leave headroom.
    return 4 << 20, 48 << 20              # footprint: 16 MiB


def _pick_row_tile(rows, lanes, elem_bytes, target_bytes):
    """Rows per grid step: big enough to stream near the HBM roofline, small
    enough that the grid has >= ~4 steps (pipelining + v7x 2-TC split) whenever
    the input allows.  All host-side / static."""
    if rows % 8 != 0:
        return rows                        # tiny/ragged row count: one full-extent block
    max_rows_by_bytes = max(8, (target_bytes // (lanes * elem_bytes)) // 8 * 8)
    min_steps = 4
    rows_for_min_steps = max(8, pl.cdiv(rows, min_steps * 8) * 8)
    row_tile = min(rows, max_rows_by_bytes, rows_for_min_steps)
    # Prefer an even step count (balances v7x's two TensorCores) if reachable
    # by shrinking the tile a little.
    steps = pl.cdiv(rows, row_tile)
    if steps > 1 and steps % 2 == 1:
        cand = row_tile - 8
        while cand >= 8:
            s = pl.cdiv(rows, cand)
            if s > 2 * steps:              # shrinking further only inflates step count
                break
            if s % 2 == 0:
                row_tile = cand
                break
            cand -= 8
    return row_tile


def swish_pallas(x, beta, *, donate_x=False):
    """Swish(x) = x / (1 + exp(-beta * x)) applied to the flattened input.

    Returns an (N,) array with N = x.size; floating input dtype is preserved,
    non-floating inputs produce float32 (cast happens in-kernel).
    """
    x = jnp.asarray(x)
    x_flat = x.reshape(-1)                 # metadata-only for contiguous inputs
    n = x_flat.shape[0]
    out_dtype = x.dtype if jnp.issubdtype(x.dtype, jnp.floating) else jnp.float32

    layout = _choose_layout(n)
    needs_pad = layout is None
    if needs_pad:
        # Rare ragged case (N % 128 != 0): pad to the next multiple of 1024 and
        # slice afterwards.  This costs one extra HBM pass; a masked-tail kernel
        # would avoid it but is not worth the complexity at this module's sizes.
        n_pad = pl.cdiv(n, 1024) * 1024
        x_flat = jnp.pad(x_flat, (0, n_pad - n))
        rows, lanes = _choose_layout(n_pad)
    else:
        rows, lanes = layout

    x2d = x_flat.reshape(rows, lanes)      # metadata-only reshape, no HBM pass
    in_bytes = jnp.dtype(x2d.dtype).itemsize
    out_bytes = jnp.dtype(out_dtype).itemsize

    target_tile_bytes, vmem_limit = _device_memory_config()
    row_tile = _pick_row_tile(rows, lanes, max(in_bytes, out_bytes), target_tile_bytes)
    grid = (pl.cdiv(rows, row_tile),)      # partial edge block handled by Pallas

    beta_arr = jnp.asarray(beta, dtype=jnp.float32).reshape(1, 1)

    n_elems = rows * lanes
    cost = pl.CostEstimate(
        flops=5 * n_elems,
        transcendentals=n_elems,
        bytes_accessed=n_elems * (in_bytes + out_bytes),
    )

    aliases = {}
    if donate_x and not needs_pad and x2d.dtype == jnp.dtype(out_dtype):
        aliases = {1: 0}                   # x (input #1, after beta) aliases the output

    out2d = pl.pallas_call(
        _swish_kernel,
        out_shape=jax.ShapeDtypeStruct((rows, lanes), out_dtype),
        grid_spec=pltpu.PrefetchScalarGridSpec(
            num_scalar_prefetch=0,
            grid=grid,
            in_specs=[
                pl.BlockSpec(memory_space=pltpu.SMEM),               # beta (1,1)
                pl.BlockSpec((row_tile, lanes), lambda i: (i, 0)),   # x tile
            ],
            out_specs=pl.BlockSpec((row_tile, lanes), lambda i: (i, 0)),
        ),
        compiler_params=pltpu.CompilerParams(
            dimension_semantics=("parallel",),   # lets v7x shard grid steps over its 2 TCs
            vmem_limit_bytes=vmem_limit,
        ),
        cost_estimate=cost,
        input_output_aliases=aliases,
    )(beta_arr, x2d)

    y = out2d.reshape(-1)
    if needs_pad:
        y = y[:n]
    return y


if __name__ == "__main__":
    key = jax.random.PRNGKey(0)
    beta = 0.1  # deterministic "learnable" parameter, matching the default init

    def ref_swish(xf, b):
        xf = xf.reshape(-1).astype(jnp.float32)
        return xf / (1.0 + jnp.exp(-b * xf))

    # 1) Small input consistent with the module: arbitrary shape, flattened inside.
    x = jax.random.normal(key, (2, 4, 16, 16), dtype=jnp.float32)
    y = jax.block_until_ready(swish_pallas(x, beta))
    assert y.shape == (x.size,)
    assert y.dtype == x.dtype
    # tanh-based sigmoid is mathematically identical; allow a few f32 ulps vs exp form.
    assert jnp.allclose(y, ref_swish(x, beta), atol=1e-5, rtol=1e-5)

    # 2) Moderate input that exercises the multi-step (pipelined) grid path.
    x_big = jax.random.normal(jax.random.PRNGKey(1), (256, 1024), dtype=jnp.float32)
    y_big = jax.block_until_ready(swish_pallas(x_big, beta))
    assert y_big.shape == (x_big.size,)
    assert jnp.allclose(y_big, ref_swish(x_big, beta), atol=1e-5, rtol=1e-5)

    # 3) Ragged N (not a multiple of 128) exercises the fallback path.
    x_rag = jax.random.normal(jax.random.PRNGKey(2), (1000,), dtype=jnp.float32)
    y_rag = jax.block_until_ready(swish_pallas(x_rag, beta))
    assert y_rag.shape == (1000,)
    assert jnp.allclose(y_rag, ref_swish(x_rag, beta), atol=1e-5, rtol=1e-5)

    # 4) dtype is preserved end-to-end (bf16 stays bf16 through HBM).
    xb = x.astype(jnp.bfloat16)
    yb = jax.block_until_ready(swish_pallas(xb, beta))
    assert yb.dtype == jnp.bfloat16
    yb_ref = ref_swish(xb.astype(jnp.float32), beta)
    assert jnp.allclose(yb.astype(jnp.float32), yb_ref, atol=1e-2, rtol=1e-2)

    print("KERNEL_OK")
</pallas_src>

<mosaic_0001>
module attributes {stable_mosaic.version = 11 : i64} {
  func.func @_swish_kernel(%arg0: i32, %arg1: memref<1x1xf32, #tpu.memory_space<smem>>, %arg2: memref<8x256xf32, #tpu.memory_space<vmem>>, %arg3: memref<8x256xf32, #tpu.memory_space<vmem>>) attributes {dimension_semantics = [#tpu.dimension_semantics<parallel>], iteration_bounds = array<i64: 1>, scalar_prefetch = 0 : i64, scratch_operands = 0 : i64, tpu.core_type = #tpu.core_type<tc>, window_params = [{transform_indices = @transform_0, window_bounds = array<i64: 1, 1>}, {transform_indices = @transform_1, window_bounds = array<i64: 8, 256>}, {transform_indices = @transform_2, window_bounds = array<i64: 8, 256>}]} {
    %c0 = arith.constant 0 : index
    %c0_0 = arith.constant 0 : index
    %0 = memref.load %arg1[%c0, %c0_0] : memref<1x1xf32, #tpu.memory_space<smem>>
    %c0_1 = arith.constant 0 : index
    %c0_2 = arith.constant 0 : index
    %1 = vector.load %arg2[%c0_1, %c0_2] : memref<8x256xf32, #tpu.memory_space<vmem>>, vector<8x256xf32>
    %cst = arith.constant 5.000000e-01 : f32
    %2 = arith.mulf %cst, %0 : f32
    %3 = vector.broadcast %2 : f32 to vector<8x256xf32>
    %4 = arith.mulf %3, %1 : vector<8x256xf32>
    %5 = math.tanh %4 : vector<8x256xf32>
    %cst_3 = arith.constant 1.000000e+00 : f32
    %6 = vector.broadcast %cst_3 : f32 to vector<8x256xf32>
    %7 = arith.addf %6, %5 : vector<8x256xf32>
    %cst_4 = arith.constant 5.000000e-01 : f32
    %8 = vector.broadcast %cst_4 : f32 to vector<8x256xf32>
    %9 = arith.mulf %8, %7 : vector<8x256xf32>
    %10 = arith.mulf %1, %9 : vector<8x256xf32>
    %c0_5 = arith.constant 0 : index
    %c0_6 = arith.constant 0 : index
    %11 = vector.load %arg3[%c0_5, %c0_6] : memref<8x256xf32, #tpu.memory_space<vmem>>, vector<8x256xf32>
    tpu.vector_store %arg3[%c0_5, %c0_6], %10 {strides = array<i32>} : memref<8x256xf32, #tpu.memory_space<vmem>>, vector<8x256xf32>,
    return
  }
  func.func @transform_0(%arg0: i32) -> (i32, i32) {
    %c0_i32 = arith.constant 0 : i32
    %c0_i32_0 = arith.constant 0 : i32
    %c0_i32_1 = arith.constant 0 : i32
    return %c0_i32, %c0_i32_0 : i32, i32
  }
  func.func @transform_1(%arg0: i32) -> (i32, i32) {
    %c0_i32 = arith.constant 0 : i32
    %c0_i32_0 = arith.constant 0 : i32
    return %arg0, %c0_i32 : i32, i32
  }
  func.func @transform_2(%arg0: i32) -> (i32, i32) {
    %c0_i32 = arith.constant 0 : i32
    %c0_i32_0 = arith.constant 0 : i32
    return %arg0, %c0_i32 : i32, i32
  }
}

</mosaic_0001>

<llo_original>
// kernel: tpu_custom_call.1
$region0: #{tpu_custom_call.1}
  #allocation0 [shape = 'u32[]', space=smem, size = 0x4, offset = 0x4, fixed_abs, tag = 'smem constant byte address 0x4 - core index']
  #allocation1 [shape = 'u32[144,128]{1,0:T(1,128)}', space=vmem, size = 0x12000, scoped, tag = 'internal scratch']
  #allocation2 [shape = 'f32[1,1]{1,0:T(1,128)S(6)}', space=smem, size = 0x200, scoped, tag = 'scoped memory for tpu_custom_call.1']
  %s0 = inlined_call_operand.<no memory space> [shape: f32[1,1], index: 0, kind: input, shape index: {}]
  %s1 = inlined_call_operand.hbm [shape: f32[8,256], index: 1, kind: input, shape index: {}]
  %s2 = inlined_call_operand.hbm [shape: f32[8,256], index: 2, kind: output, shape index: {}]
  %s3 = sld [smem:[#allocation0]]
  $region22: #{tpu_custom_call.1} parent=0
    _
  %s5 = ssub.s32 1, %s3
  %s6 = scalar_select 0, %s5, %s3
  %7 = sst [smem:[#allocation2]] %s0
  $region1: #{tpu_custom_call.1} parent=0
    #allocation3 [shape = 'u8[8192]{0}', space=vmem, size = 0x2000, scoped, tag = 'input window, operand 1, single buffered']
    #allocation4 [shape = 's32[1]{0}', space=sflag, size = 0x4, scoped, tag = 'scoped memory for tpu_custom_call.1']
    #allocation5 [shape = 's32[1]{0}', space=sflag, size = 0x4, scoped, tag = 'scoped memory for tpu_custom_call.1']
    #allocation6 [shape = 'u8[8192]{0}', space=vmem, size = 0x2000, scoped, tag = 'output window, operand 0, single buffered']
    %8 = vsyncpa [#allocation4], 0
    %9 = vsyncpa [#allocation5], 0
    // Predicated region
    $region2: #{tpu_custom_call.1} parent=1 // pred_check
      _
    $region3: #{tpu_custom_call.1} parent=1 // pred_check_branch
      %11 = sbr.rel (0) target = $region5
    $region4: #{tpu_custom_call.1} parent=1 // pred_region
      _
    $region5: #{tpu_custom_call.1} parent=1 // pred_fallthru
      _
    // Predicated region
    $region6: #{tpu_custom_call.1} parent=1 // pred_check
      _
    $region7: #{tpu_custom_call.1} parent=1 // pred_check_branch
      %13 = sbr.rel (0) target = $region9
    $region8: #{tpu_custom_call.1} parent=1 // pred_region
      %s15 = ssub.s32 256, 256
      %16 = vsyncadd [#allocation4], %s15
      %s18 = sshll.u32 [#allocation3], 4
      %s19 = int_to_ptr.vmem [resolvable:$true] %s18
      %21 = dma.hbm_to_vmem [thread:$0]  %s1, 256, %s19, [#allocation4]
    $region9: #{tpu_custom_call.1} parent=1 // pred_fallthru
      _
    // Predicated region
    $region10: #{tpu_custom_call.1} parent=1 // pred_check
      _
    $region11: #{tpu_custom_call.1} parent=1 // pred_check_branch
      %23 = sbr.rel (0) target = $region13
    $region12: #{tpu_custom_call.1} parent=1 // pred_region
      %24 = dma.done [#allocation4], 256
    $region13: #{tpu_custom_call.1} parent=1 // pred_fallthru
      _
    %s25 = sld [smem:[#allocation2]]
    %v26 = vld [vmem:[#allocation3] sm:$0xff]
    %v27 = vld [vmem:[#allocation3 + $0x8] sm:$0xff]
    %s28 = smul.f32 %s25, 0.5
    %v29 = vstv %s28
    %v30 = vmul.f32 %v29, %v26
    %v31 = vmul.f32 %v29, %v27
    %v32 = vtanh.pop %v30
    %v33 = vtanh.pop %v31
    %v34 = vadd.f32 %v32, 1.0
    %v35 = vadd.f32 %v33, 1.0
    %v36 = vmul.f32 %v34, 0.5
    %v37 = vmul.f32 %v35, 0.5
    %v38 = vmul.f32 %v26, %v36
    %v39 = vmul.f32 %v27, %v37
    %40 = vst [vmem:[#allocation6] sm:$0xff] %v38
    %41 = vst [vmem:[#allocation6 + $0x8] sm:$0xff] %v39
    // Predicated region
    $region14: #{tpu_custom_call.1} parent=1 // pred_check
      _
    $region15: #{tpu_custom_call.1} parent=1 // pred_check_branch
      %43 = sbr.rel (0) target = $region17
    $region16: #{tpu_custom_call.1} parent=1 // pred_region
      %s45 = ssub.s32 256, 256
      %46 = vsyncadd [#allocation5], %s45
      %s48 = sshll.u32 [#allocation6], 4
      %s49 = int_to_ptr.vmem [resolvable:$true] %s48
      %51 = dma.vmem_to_hbm [thread:$0]  %s49, 256, %s2, [#allocation5]
    $region17: #{tpu_custom_call.1} parent=1 // pred_fallthru
      _
    // Predicated region
    $region18: #{tpu_custom_call.1} parent=1 // pred_check
      _
    $region19: #{tpu_custom_call.1} parent=1 // pred_check_branch
      %53 = sbr.rel (0) target = $region21
    $region20: #{tpu_custom_call.1} parent=1 // pred_region
      %54 = dma.done [#allocation5], 256
    $region21: #{tpu_custom_call.1} parent=1 // pred_fallthru
      _
    %55 = vsyncpa [#allocation4], 1
    %56 = vsyncpa [#allocation5], 1

</llo_original>
